<compile_context>
chip_gen: v7x
topology: tpu7x:2x2x1
jax: 0.10.0
libtpu: 0.0.40
codegen_flags: <defaults>
</compile_context>

<pallas_src>
import functools

import jax
import jax.numpy as jnp
from jax.experimental import pallas as pl
from jax.experimental.pallas import tpu as pltpu

TILE_ROWS = 4096   # packed [*, 128] rows per grid step (= TILE_ROWS * (128//F) batch rows)


def _pick_tile(nrows, max_tile, min_steps=4):
    """Largest multiple-of-8 tile <= max_tile, aiming for >= min_steps grid steps."""
    if nrows <= 8:
        return nrows
    t = min(max_tile, pl.cdiv(nrows, min_steps))
    t = max(8, (t // 8) * 8)
    return t


# ---------------------------------------------------------------------------
# Fast path: F divides 128 -> pack G = 128 // F batch rows per 128-lane row.
# ---------------------------------------------------------------------------
def _svm_packed_kernel(w_ref, sel_ref, b_ref, x_ref, o_ref):
    # w_ref:   [1, 128]    w tiled G times across lanes (resident across grid)
    # sel_ref: [128, G]    0/1 selection matrix (resident across grid)
    # b_ref:   [1]         bias scalar in SMEM
    # x_ref:   [tile_r, 128]  G batch rows packed per vreg row
    # o_ref:   [tile_r, G]
    y = x_ref[...].astype(jnp.float32) * w_ref[...]          # exact f32 on the VPU
    # Segmented 16-lane reduce via a constant 0/1 matmul on the otherwise-idle MXU.
    o_ref[...] = (
        jnp.dot(y, sel_ref[...], preferred_element_type=jnp.float32) + b_ref[0]
    )


def _svm_packed(x, w, b_smem, max_tile_rows):
    B, F = x.shape
    G = 128 // F
    R = B // G

    xp = x.reshape(R, 128)                                    # free contiguous view
    w_tiled = jnp.tile(w, G).reshape(1, 128)                  # tiny, constant-folded
    sel = (
        jnp.arange(128)[:, None] // F == jnp.arange(G)[None, :]
    ).astype(jnp.float32)                                     # [128, G] 0/1

    tile_r = _pick_tile(R, max_tile_rows)
    grid = (pl.cdiv(R, tile_r),)

    out = pl.pallas_call(
        _svm_packed_kernel,
        out_shape=jax.ShapeDtypeStruct((R, G), jnp.float32),
        grid=grid,
        in_specs=[
            pl.BlockSpec((1, 128), lambda i: (0, 0)),               # tiled weights
            pl.BlockSpec((128, G), lambda i: (0, 0)),               # selection matrix
            pl.BlockSpec(memory_space=pltpu.MemorySpace.SMEM),      # bias scalar
            pl.BlockSpec((tile_r, 128), lambda i: (i, 0)),          # packed x tile
        ],
        out_specs=pl.BlockSpec((tile_r, G), lambda i: (i, 0)),
        compiler_params=pltpu.CompilerParams(
            dimension_semantics=("parallel",),      # megacore sharding on v7x
        ),
        cost_estimate=pl.CostEstimate(
            flops=B * F + 2 * B * 128,              # VPU mul + selection matmul
            transcendentals=0,
            bytes_accessed=B * F * x.dtype.itemsize + (B + 128 + 128 * G + 1) * 4,
        ),
    )(w_tiled, sel, b_smem, xp)
    return out.reshape(B, 1)                                  # free contiguous view


# ---------------------------------------------------------------------------
# Generic fallback: native [B, F] block, VPU multiply + XLU lane reduce.
# ---------------------------------------------------------------------------
def _svm_rowblock_kernel(w_ref, b_ref, x_ref, o_ref):
    # w_ref: [1, F] resident, b_ref: [1] SMEM, x_ref: [tile_b, F], o_ref: [tile_b, 1]
    y = x_ref[...].astype(jnp.float32) * w_ref[...]
    o_ref[...] = jnp.sum(y, axis=1, keepdims=True) + b_ref[0]


def _svm_rowblock(x, w, b_smem, max_tile_rows):
    B, F = x.shape
    lanes_f = ((F + 127) // 128) * 128
    # Cap the tile so one (lane-padded) x buffer stays around 2 MiB of VMEM.
    tile_cap = max(8, ((2 * 1024 * 1024) // (lanes_f * 4)) // 8 * 8)
    tile_b = _pick_tile(B, min(tile_cap, 8 * max_tile_rows))
    grid = (pl.cdiv(B, tile_b),)

    out = pl.pallas_call(
        _svm_rowblock_kernel,
        out_shape=jax.ShapeDtypeStruct((B, 1), jnp.float32),
        grid=grid,
        in_specs=[
            pl.BlockSpec((1, F), lambda i: (0, 0)),                 # weights resident
            pl.BlockSpec(memory_space=pltpu.MemorySpace.SMEM),      # bias scalar
            pl.BlockSpec((tile_b, F), lambda i: (i, 0)),            # x batch tile
        ],
        out_specs=pl.BlockSpec((tile_b, 1), lambda i: (i, 0)),
        compiler_params=pltpu.CompilerParams(
            dimension_semantics=("parallel",),
        ),
        cost_estimate=pl.CostEstimate(
            flops=2 * B * F,
            transcendentals=0,
            bytes_accessed=B * F * x.dtype.itemsize + (B + F + 1) * 4,
        ),
    )(w.reshape(1, F), b_smem, x)
    return out


# ---------------------------------------------------------------------------
# Public forward: x [B, num_ins], w [num_ins], b [1]  ->  [B, 1]
# ---------------------------------------------------------------------------
@functools.partial(jax.jit, static_argnames=("max_tile_rows",))
def svm_forward(x, w, b, *, max_tile_rows=TILE_ROWS):
    B, F = x.shape
    w = w.reshape(F).astype(jnp.float32)
    b_smem = b.reshape(1).astype(jnp.float32)
    if F <= 128 and 128 % F == 0 and B % (128 // F) == 0:
        return _svm_packed(x, w, b_smem, max_tile_rows)
    return _svm_rowblock(x, w, b_smem, max_tile_rows)


if __name__ == "__main__":
    key = jax.random.PRNGKey(0)
    kx, kw, kb = jax.random.split(key, 3)

    B, NUM_INS = 1024, 16                      # packed path: 128 rows x 128 lanes, 4 grid steps
    x = jax.random.normal(kx, (B, NUM_INS), jnp.float32)
    # Mimic torch.nn.Linear default init: U(-1/sqrt(fan_in), +1/sqrt(fan_in)).
    bound = 1.0 / (NUM_INS ** 0.5)
    w = jax.random.uniform(kw, (NUM_INS,), jnp.float32, -bound, bound)
    b = jax.random.uniform(kb, (1,), jnp.float32, -bound, bound)

    out = jax.block_until_ready(svm_forward(x, w, b))
    ref = jnp.sum(x * w[None, :], axis=1, keepdims=True) + b   # exact f32 reference

    assert out.shape == (B, 1), out.shape
    assert jnp.allclose(out, ref, atol=1e-4, rtol=1e-4), (out[:4], ref[:4])
    print("KERNEL_OK")
</pallas_src>

<mosaic_0001>
module attributes {stable_mosaic.version = 11 : i64} {
  func.func @_svm_packed_kernel(%arg0: i32, %arg1: memref<1x128xf32, #tpu.memory_space<vmem>>, %arg2: memref<128x8xf32, #tpu.memory_space<vmem>>, %arg3: memref<1xf32, #tpu.memory_space<smem>>, %arg4: memref<32x128xf32, #tpu.memory_space<vmem>>, %arg5: memref<32x8xf32, #tpu.memory_space<vmem>>) attributes {dimension_semantics = [#tpu.dimension_semantics<parallel>], iteration_bounds = array<i64: 4>, scalar_prefetch = 0 : i64, scratch_operands = 0 : i64, tpu.core_type = #tpu.core_type<tc>, window_params = [{pipeline_mode = #tpu.pipeline_mode<synchronous>, transform_indices = @transform_0, window_bounds = array<i64: 1, 128>}, {pipeline_mode = #tpu.pipeline_mode<synchronous>, transform_indices = @transform_1, window_bounds = array<i64: 128, 8>}, {transform_indices = @transform_2, window_bounds = array<i64: 1>}, {transform_indices = @transform_3, window_bounds = array<i64: 32, 128>}, {transform_indices = @transform_4, window_bounds = array<i64: 32, 8>}]} {
    %c0 = arith.constant 0 : index
    %c0_0 = arith.constant 0 : index
    %0 = vector.load %arg4[%c0, %c0_0] : memref<32x128xf32, #tpu.memory_space<vmem>>, vector<32x128xf32>
    %c0_1 = arith.constant 0 : index
    %c0_2 = arith.constant 0 : index
    %1 = vector.load %arg1[%c0_1, %c0_2] : memref<1x128xf32, #tpu.memory_space<vmem>>, vector<1x128xf32>
    %2 = vector.broadcast %1 : vector<1x128xf32> to vector<32x128xf32>
    %3 = arith.mulf %0, %2 : vector<32x128xf32>
    %c0_3 = arith.constant 0 : index
    %c0_4 = arith.constant 0 : index
    %4 = vector.load %arg2[%c0_3, %c0_4] : memref<128x8xf32, #tpu.memory_space<vmem>>, vector<128x8xf32>
    %cst = arith.constant dense<0.000000e+00> : vector<32x8xf32>
    %5 = tpu.matmul %3, %4, %cst {dimension_numbers = #tpu.dot_dimension_numbers<[1], [0], [0], [1], [0, 0, 1, 1], [], []>} : vector<32x128xf32>, vector<128x8xf32>, vector<32x8xf32> -> vector<32x8xf32>
    %c0_5 = arith.constant 0 : index
    %6 = memref.load %arg3[%c0_5] : memref<1xf32, #tpu.memory_space<smem>>
    %7 = vector.broadcast %6 : f32 to vector<32x8xf32>
    %8 = arith.addf %5, %7 : vector<32x8xf32>
    %c0_6 = arith.constant 0 : index
    %c0_7 = arith.constant 0 : index
    %9 = vector.load %arg5[%c0_6, %c0_7] : memref<32x8xf32, #tpu.memory_space<vmem>>, vector<32x8xf32>
    tpu.vector_store %arg5[%c0_6, %c0_7], %8 {strides = array<i32>} : memref<32x8xf32, #tpu.memory_space<vmem>>, vector<32x8xf32>,
    return
  }
  func.func @transform_0(%arg0: i32) -> (i32, i32) {
    %c0_i32 = arith.constant 0 : i32
    %c0_i32_0 = arith.constant 0 : i32
    %c0_i32_1 = arith.constant 0 : i32
    return %c0_i32, %c0_i32_0 : i32, i32
  }
  func.func @transform_1(%arg0: i32) -> (i32, i32) {
    %c0_i32 = arith.constant 0 : i32
    %c0_i32_0 = arith.constant 0 : i32
    %c0_i32_1 = arith.constant 0 : i32
    return %c0_i32, %c0_i32_0 : i32, i32
  }
  func.func @transform_2(%arg0: i32) -> i32 {
    %c0_i32 = arith.constant 0 : i32
    %c0_i32_0 = arith.constant 0 : i32
    return %c0_i32 : i32
  }
  func.func @transform_3(%arg0: i32) -> (i32, i32) {
    %c0_i32 = arith.constant 0 : i32
    %c0_i32_0 = arith.constant 0 : i32
    return %arg0, %c0_i32 : i32, i32
  }
  func.func @transform_4(%arg0: i32) -> (i32, i32) {
    %c0_i32 = arith.constant 0 : i32
    %c0_i32_0 = arith.constant 0 : i32
    return %arg0, %c0_i32 : i32, i32
  }
}

</mosaic_0001>

<llo_original>
// kernel: tile.9
$region0: #{tile.9}
  %s0 = inlined_call_operand.vmem [shape: f32[8,16], index: 0, kind: input, shape index: {}]
  %s1 = inlined_call_operand.vmem [shape: f32[1,128], index: 1, kind: output, shape index: {}]
  $region1: #{tile.9} parent=0
    #allocation0 [shape = 'u8[4096]{0}', space=vmem, size = 0x1000, scoped, tag = 'scoped mem for output reshape']
    %v2 = vld [vmem:[%s0] sm:$0x1]
    %vm3 = vcmask 130048
    %4 = vst.msk [vmem:[#allocation0] sm:$0x1] %vm3, %v2
    %s5 = scalar_lea.vmem %s0, 7
    %v6 = vld [vmem:[%s5] sm:$0x1]
    %7 = vrot.lane.b32.xlu0 %v6, 112
    %v8 = vpop.permute.xlu0 %7
    %vm9 = vcmask 1048448
    %10 = vst.msk [vmem:[#allocation0] sm:$0x1] %vm9, %v8
    %s11 = scalar_lea.vmem %s0, 6
    %v12 = vld [vmem:[%s11] sm:$0x1]
    %13 = vrot.lane.b32.xlu0 %v12, 96
    %v14 = vpop.permute.xlu0 %13
    %vm15 = vcmask 917248
    %16 = vst.msk [vmem:[#allocation0] sm:$0x1] %vm15, %v14
    %s17 = scalar_lea.vmem %s0, 5
    %v18 = vld [vmem:[%s17] sm:$0x1]
    %19 = vrot.lane.b32.xlu0 %v18, 80
    %v20 = vpop.permute.xlu0 %19
    %vm21 = vcmask 786048
    %22 = vst.msk [vmem:[#allocation0] sm:$0x1] %vm21, %v20
    %s23 = scalar_lea.vmem %s0, 4
    %v24 = vld [vmem:[%s23] sm:$0x1]
    %25 = vrot.lane.b32.xlu0 %v24, 64
    %v26 = vpop.permute.xlu0 %25
    %vm27 = vcmask 654848
    %28 = vst.msk [vmem:[#allocation0] sm:$0x1] %vm27, %v26
    %s29 = scalar_lea.vmem %s0, 3
    %v30 = vld [vmem:[%s29] sm:$0x1]
    %31 = vrot.lane.b32.xlu0 %v30, 48
    %v32 = vpop.permute.xlu0 %31
    %vm33 = vcmask 523648
    %34 = vst.msk [vmem:[#allocation0] sm:$0x1] %vm33, %v32
    %s35 = scalar_lea.vmem %s0, 2
    %v36 = vld [vmem:[%s35] sm:$0x1]
    %37 = vrot.lane.b32.xlu0 %v36, 32
    %v38 = vpop.permute.xlu0 %37
    %vm39 = vcmask 392448
    %40 = vst.msk [vmem:[#allocation0] sm:$0x1] %vm39, %v38
    %s41 = scalar_lea.vmem %s0, 1
    %v42 = vld [vmem:[%s41] sm:$0x1]
    %43 = vrot.lane.b32.xlu0 %v42, 16
    %v44 = vpop.permute.xlu0 %43
    %vm45 = vcmask 261248
    %46 = vst.msk [vmem:[#allocation0] sm:$0x1] %vm45, %v44
    %s48 = sshllo.u32 0, 1
    %v50 = vld [vmem:[#allocation0] sm:%s48]
    %s51 = sshllo.u32 0, 1
    %52 = vst [vmem:[%s1] sm:%s51] %v50

// kernel: tile.8
$region0: #{tile.8}
  #allocation0 [shape = 's32[1]{0}', space=sflag, size = 0x4, scoped, tag = 'scoped memory for tile.8']
  %s0 = inlined_call_operand.vmem [shape: f32[16], index: 0, kind: input, shape index: {}]
  %s1 = inlined_call_operand.vmem [shape: f32[8,16], index: 1, kind: output, shape index: {}]
  // Predicated region
  $region2: #{tile.8} parent=0 // pred_check
    _
  $region3: #{tile.8} parent=0 // pred_check_branch
    %3 = sbr.rel (0) target = $region5
  $region4: #{tile.8} parent=0 // pred_region
    _
  $region5: #{tile.8} parent=0 // pred_fallthru
    _
  %v4 = vld [vmem:[%s0] ss:$0 sm:$0xff]
  %5 = vst [vmem:[%s1] sm:$0xff] %v4

// kernel: svm_forward.1
$region0: #{svm_forward.1}
  #allocation0 [shape = 'u32[]', space=smem, size = 0x4, offset = 0x4, fixed_abs, tag = 'smem constant byte address 0x4 - core index']
  #allocation1 [shape = 'u32[144,128]{1,0:T(1,128)}', space=vmem, size = 0x12000, scoped, tag = 'internal scratch']
  #allocation2 [shape = 'f32[1]{0:T(128)S(6)}', space=smem, size = 0x200, scoped, tag = 'scoped memory for svm_forward.1']
  %s0 = inlined_call_operand.vmem [shape: f32[1,128], index: 0, kind: input, shape index: {}]
  %s1 = inlined_call_operand.vmem [shape: f32[128,8], index: 1, kind: input, shape index: {}]
  %s2 = inlined_call_operand.<no memory space> [shape: f32[1], index: 2, kind: input, shape index: {}]
  %s3 = inlined_call_operand.vmem [shape: f32[128,128], index: 3, kind: input, shape index: {}]
  %s4 = inlined_call_operand.vmem [shape: f32[128,8], index: 4, kind: output, shape index: {}]
  %s5 = sld [smem:[#allocation0]]
  $region49: #{svm_forward.1} parent=0
    _
  %s7 = ssub.s32 1, %s5
  %s8 = scalar_select 0, %s7, %s5
  %9 = sst [smem:[#allocation2]] %s2
  loop: start=0, step=1, limit=6
  $region2: #{svm_forward.1} parent=0 // loop_pre_header
    _
  $region3: #{svm_forward.1} parent=0 // loop_header
    %s11 = sphi 0, %s15
    %p12 = scmp.ge.s32.totalorder %s11, 6
    %s19 = sphi 0, %s19
    %s21 = sphi 0, %s19
    %s22 = sphi 0, %s21
    %s36 = sphi 0, %s22
    %s40 = sphi 0, %s40
    %s42 = sphi 0, %s40
    %s43 = sphi 0, %s42
    %s57 = sphi 0, %s43
    %s61 = sphi 0, %s61
    %s63 = sphi 0, %s61
    %s64 = sphi 0, %s63
    %s78 = sphi 0, %s64
    %s84 = sphi 0, %s86
    %s87 = sphi 0, %s84
    %s88 = sphi 0, %s87
    %s104 = sphi 0, %s88
    %s110 = sphi 0, %s112
    %s113 = sphi 0, %s110
    %s114 = sphi 0, %s113
    %s130 = sphi 0, %s114
  $region4: #{svm_forward.1} parent=0 // loop_header_branch
    %14 = sbr.rel (%p12) target = $region8
  $region5: #{svm_forward.1} parent=0 // loop_body
    %s16 = ssub.s32 %s11, 1
    %s17 = ssub.s32 %s11, 2
    %s18 = sadd.s32 %s11, 1
    %s20 = sadd.s32 %s19, 1
    %p23 = scmp.eq.s32.totalorder %s11, 3
    %p24 = scmp.ne.s32.totalorder %s19, %s21
    %p25 = scmp.eq.s32.totalorder %s11, 0
    %p26 = por %p24, %p25
    %p27 = scmp.ne.s32.totalorder %s19, %s21
    %p28 = scmp.eq.s32.totalorder %s16, 3
    %p29 = por %p27, %p28
    %p30 = scmp.ne.s32.totalorder %s21, %s22
    %p31 = scmp.eq.s32.totalorder %s16, 0
    %p32 = por %p30, %p31
    %p33 = scmp.ne.s32.totalorder %s21, %s22
    %p34 = scmp.eq.s32.totalorder %s17, 3
    %p35 = por %p33, %p34
    %p37 = scmp.ne.s32.totalorder %s22, %s36
    %p38 = scmp.eq.s32.totalorder %s17, 0
    %p39 = por %p37, %p38
    %s41 = sadd.s32 %s40, 1
    %p44 = scmp.eq.s32.totalorder %s11, 3
    %p45 = scmp.ne.s32.totalorder %s40, %s42
    %p46 = scmp.eq.s32.totalorder %s11, 0
    %p47 = por %p45, %p46
    %p48 = scmp.ne.s32.totalorder %s40, %s42
    %p49 = scmp.eq.s32.totalorder %s16, 3
    %p50 = por %p48, %p49
    %p51 = scmp.ne.s32.totalorder %s42, %s43
    %p52 = scmp.eq.s32.totalorder %s16, 0
    %p53 = por %p51, %p52
    %p54 = scmp.ne.s32.totalorder %s42, %s43
    %p55 = scmp.eq.s32.totalorder %s17, 3
    %p56 = por %p54, %p55
    %p58 = scmp.ne.s32.totalorder %s43, %s57
    %p59 = scmp.eq.s32.totalorder %s17, 0
    %p60 = por %p58, %p59
    %s62 = sadd.s32 %s61, 1
    %p65 = scmp.eq.s32.totalorder %s11, 3
    %p66 = scmp.ne.s32.totalorder %s61, %s63
    %p67 = scmp.eq.s32.totalorder %s11, 0
    %p68 = por %p66, %p67
    %p69 = scmp.ne.s32.totalorder %s61, %s63
    %p70 = scmp.eq.s32.totalorder %s16, 3
    %p71 = por %p69, %p70
    %p72 = scmp.ne.s32.totalorder %s63, %s64
    %p73 = scmp.eq.s32.totalorder %s16, 0
    %p74 = por %p72, %p73
    %p75 = scmp.ne.s32.totalorder %s63, %s64
    %p76 = scmp.eq.s32.totalorder %s17, 3
    %p77 = por %p75, %p76
    %p79 = scmp.ne.s32.totalorder %s64, %s78
    %p80 = scmp.eq.s32.totalorder %s17, 0
    %p81 = por %p79, %p80
    %s82 = ssub.s32 %s11, %s18
    %p83 = scmp.eq.s32.totalorder %s82, 0
    %s85 = sadd.s32 %s84, 1
    %s86 = scalar_select %p83, %s84, %s85
    %p89 = pneg %p83
    %p90 = scmp.eq.s32.totalorder %s11, 3
    %p91 = por %p89, %p90
    %p92 = scmp.ne.s32.totalorder %s84, %s87
    %p93 = scmp.eq.s32.totalorder %s11, 0
    %p94 = por %p92, %p93
    %p95 = scmp.ne.s32.totalorder %s84, %s87
    %p96 = scmp.eq.s32.totalorder %s16, 3
    %p97 = por %p95, %p96
    %p98 = scmp.ne.s32.totalorder %s87, %s88
    %p99 = scmp.eq.s32.totalorder %s16, 0
    %p100 = por %p98, %p99
    %p101 = scmp.ne.s32.totalorder %s87, %s88
    %p102 = scmp.eq.s32.totalorder %s17, 3
    %p103 = por %p101, %p102
    %p105 = scmp.ne.s32.totalorder %s88, %s104
    %p106 = scmp.eq.s32.totalorder %s17, 0
    %p107 = por %p105, %p106
    %s108 = ssub.s32 %s11, %s18
    %p109 = scmp.eq.s32.totalorder %s108, 0
    %s111 = sadd.s32 %s110, 1
    %s112 = scalar_select %p109, %s110, %s111
    %p115 = pneg %p109
    %p116 = scmp.eq.s32.totalorder %s11, 3
    %p117 = por %p115, %p116
    %p118 = scmp.ne.s32.totalorder %s110, %s113
    %p119 = scmp.eq.s32.totalorder %s11, 0
    %p120 = por %p118, %p119
    %p121 = scmp.ne.s32.totalorder %s110, %s113
    %p122 = scmp.eq.s32.totalorder %s16, 3
    %p123 = por %p121, %p122
    %p124 = scmp.ne.s32.totalorder %s113, %s114
    %p125 = scmp.eq.s32.totalorder %s16, 0
    %p126 = por %p124, %p125
    %p127 = scmp.ne.s32.totalorder %s113, %s114
    %p128 = scmp.eq.s32.totalorder %s17, 3
    %p129 = por %p127, %p128
    %p131 = scmp.ne.s32.totalorder %s114, %s130
    %p132 = scmp.eq.s32.totalorder %s17, 0
    %p133 = por %p131, %p132
    %p134 = scmp.le.s32.totalorder 1, %s11
    %p135 = scmp.lt.s32.totalorder %s11, 5
    %p136 = pnand %p134, %p135
    %p137 = pneg %p136
    // Predicated region
    $region9: #{svm_forward.1} parent=5 // pred_check
      _
    $region10: #{svm_forward.1} parent=5 // pred_check_branch
      %139 = sbr.rel (%p136) target = $region12
    $region11: #{svm_forward.1} parent=5 // pred_region
      %s140 = ssub.s32 %s11, 1
      // Predicated region
      $region13: #{svm_forward.1} parent=11 // pred_check
        %p141 = pneg %p32
      $region14: #{svm_forward.1} parent=11 // pred_check_branch
        %143 = sbr.rel (%p141) target = $region16
      $region15: #{svm_forward.1} parent=11 // pred_region
        _
      $region16: #{svm_forward.1} parent=11 // pred_fallthru
        _
      // Predicated region
      $region17: #{svm_forward.1} parent=11 // pred_check
        %p144 = pneg %p53
      $region18: #{svm_forward.1} parent=11 // pred_check_branch
        %146 = sbr.rel (%p144) target = $region20
      $region19: #{svm_forward.1} parent=11 // pred_region
        _
      $region20: #{svm_forward.1} parent=11 // pred_fallthru
        _
      // Predicated region
      $region21: #{svm_forward.1} parent=11 // pred_check
        %p147 = pneg %p74
      $region22: #{svm_forward.1} parent=11 // pred_check_branch
        %149 = sbr.rel (%p147) target = $region24
      $region23: #{svm_forward.1} parent=11 // pred_region
        _
      $region24: #{svm_forward.1} parent=11 // pred_fallthru
        _
    $region12: #{svm_forward.1} parent=5 // pred_fallthru
      _
    %p150 = scmp.lt.s32.totalorder %s11, 4
    // Predicated region
    $region25: #{svm_forward.1} parent=5 // pred_check
      %p151 = pneg %p150
    $region26: #{svm_forward.1} parent=5 // pred_check_branch
      %153 = sbr.rel (%p151) target = $region28
    $region27: #{svm_forward.1} parent=5 // pred_region
      // Predicated region
      $region29: #{svm_forward.1} parent=27 // pred_check
        %p154 = pneg %p94
      $region30: #{svm_forward.1} parent=27 // pred_check_branch
        %156 = sbr.rel (%p154) target = $region32
      $region31: #{svm_forward.1} parent=27 // pred_region
        %s157 = smul.u32 4, %s11
        %p158 = scmp.lt.s32.totalorder %s157, 15
        %s159 = scalar_select %p158, %s157, 15
        %s160 = smul.addr %s159, 8
        %s161 = scalar_lea.vmem %s3, %s160
        %s162 = smul.u32 4, %s11
      $region32: #{svm_forward.1} parent=27 // pred_fallthru
        _
    $region28: #{svm_forward.1} parent=5 // pred_fallthru
      _
    %p163 = scmp.le.s32.totalorder 1, %s11
    %p164 = scmp.lt.s32.totalorder %s11, 5
    %p165 = pnand %p163, %p164
    %p166 = pneg %p165
    // Predicated region
    $region33: #{svm_forward.1} parent=5 // pred_check
      _
    $region34: #{svm_forward.1} parent=5 // pred_check_branch
      %168 = sbr.rel (%p165) target = $region36
    $region35: #{svm_forward.1} parent=5 // pred_region
      %s169 = ssub.s32 %s11, 1
      %p170 = pneg %p32
      %p171 = pneg %p29
      %p172 = pneg %p53
      %p173 = pneg %p50
      %p174 = pneg %p74
      %p175 = pneg %p71
      %s176 = smul.u32 4, %s16
      %p177 = scmp.lt.s32.totalorder %s176, 15
      %s178 = scalar_select %p177, %s176, 15
      %s179 = smul.addr %s178, 8
      %s180 = scalar_lea.vmem %s3, %s179
      %p181 = pneg %p100
      %p182 = pneg %p97
      %p183 = pneg %p126
      %p184 = pneg %p123
      %s185 = smul.u32 4, %s16
      %p186 = scmp.lt.s32.totalorder %s185, 15
      %s187 = scalar_select %p186, %s185, 15
      %s188 = smul.addr %s187, 8
      %s189 = scalar_lea.vmem %s4, %s188
      %s190 = smul.u32 4, %s16
      %p191 = scmp.lt.s32.totalorder %s190, 15
      %s192 = scalar_select %p191, %s190, 15
      %s193 = smul.addr %s192, 8
      %s194 = scalar_lea.vmem %s3, %s193
      %s195 = smul.u32 4, %s16
      %s196 = smul.u32 4, %s16
      %p197 = scmp.lt.s32.totalorder %s196, 15
      %s198 = scalar_select %p197, %s196, 15
      %s199 = smul.addr %s198, 8
      %s200 = scalar_lea.vmem %s4, %s199
      %s201 = smul.u32 4, %s16
      %v202 = vld [vmem:[%s194] sm:$0xff]
      %v203 = vld [vmem:[%s194 + $0x8] sm:$0xff]
      %v204 = vld [vmem:[%s194 + $0x10] sm:$0xff]
      %v205 = vld [vmem:[%s194 + $0x18] sm:$0xff]
      %v206 = vld [vmem:[%s0] sm:$0x1]
      %v208 = vlaneseq
      %v209 = vshrl.u32 %v208, 7
      %v210 = vsub.s32 0, %v209
      %v211 = vrot.slane %v206, %v210
      %v213 = vmul.f32 %v202, %v211
      %v214 = vmul.f32 %v203, %v211
      %v215 = vmul.f32 %v204, %v211
      %v216 = vmul.f32 %v205, %v211
      %v217 = vld [vmem:[%s1] sm:$0xff]
      %v218 = vld [vmem:[%s1 + $0x8] sm:$0xff]
      %v219 = vld [vmem:[%s1 + $0x10] sm:$0xff]
      %v220 = vld [vmem:[%s1 + $0x18] sm:$0xff]
      %v221 = vld [vmem:[%s1 + $0x20] sm:$0xff]
      %v222 = vld [vmem:[%s1 + $0x28] sm:$0xff]
      %v223 = vld [vmem:[%s1 + $0x30] sm:$0xff]
      %v224 = vld [vmem:[%s1 + $0x38] sm:$0xff]
      %v225 = vld [vmem:[%s1 + $0x40] sm:$0xff]
      %v226 = vld [vmem:[%s1 + $0x48] sm:$0xff]
      %v227 = vld [vmem:[%s1 + $0x50] sm:$0xff]
      %v228 = vld [vmem:[%s1 + $0x58] sm:$0xff]
      %v229 = vld [vmem:[%s1 + $0x60] sm:$0xff]
      %v230 = vld [vmem:[%s1 + $0x68] sm:$0xff]
      %v231 = vld [vmem:[%s1 + $0x70] sm:$0xff]
      %v232 = vld [vmem:[%s1 + $0x78] sm:$0xff]
      %s233 = sld [smem:[#allocation2]]
      %v234 = vstv %s233
      %235 = vmatprep.subr.mxu0 0.0
      %236 = vmatpush1.msra.mxu0 %v217
      %237 = vmatprep.subr.mxu0 0.0
      %238 = vmatpush1.msra.mxu0 %v218
      %239 = vmatprep.subr.mxu0 0.0
      %240 = vmatpush1.msra.mxu0 %v219
      %241 = vmatprep.subr.mxu0 0.0
      %242 = vmatpush1.msra.mxu0 %v220
      %243 = vmatprep.subr.mxu0 0.0
      %244 = vmatpush1.msra.mxu0 %v221
      %245 = vmatprep.subr.mxu0 0.0
      %246 = vmatpush1.msra.mxu0 %v222
      %247 = vmatprep.subr.mxu0 0.0
      %248 = vmatpush1.msra.mxu0 %v223
      %249 = vmatprep.subr.mxu0 0.0
      %250 = vmatpush1.msra.mxu0 %v224
      %251 = vmatprep.subr.mxu0 0.0
      %252 = vmatpush1.msra.mxu0 %v225
      %253 = vmatprep.subr.mxu0 0.0
      %254 = vmatpush1.msra.mxu0 %v226
      %255 = vmatprep.subr.mxu0 0.0
      %256 = vmatpush1.msra.mxu0 %v227
      %257 = vmatprep.subr.mxu0 0.0
      %258 = vmatpush1.msra.mxu0 %v228
      %259 = vmatprep.subr.mxu0 0.0
      %260 = vmatpush1.msra.mxu0 %v229
      %261 = vmatprep.subr.mxu0 0.0
      %262 = vmatpush1.msra.mxu0 %v230
      %263 = vmatprep.subr.mxu0 0.0
      %264 = vmatpush1.msra.mxu0 %v231
      %265 = vmatprep.subr.mxu0 0.0
      %266 = vmatpush1.msra.mxu0 %v232
      %267 = vmatprep.subr.mxu0 0.0
      %268 = vmatpush1.msra.mxu0 0.0
      %269 = vmatprep.subr.mxu0 0.0
      %270 = vmatpush1.msra.mxu0 0.0
      %271 = vmatprep.subr.mxu0 0.0
      %272 = vmatpush1.msra.mxu0 0.0
      %273 = vmatprep.subr.mxu0 0.0
      %274 = vmatpush1.msra.mxu0 0.0
      %275 = vmatprep.subr.mxu0 0.0
      %276 = vmatpush1.msra.mxu0 0.0
      %277 = vmatprep.subr.mxu0 0.0
      %278 = vmatpush1.msra.mxu0 0.0
      %279 = vmatprep.subr.mxu0 0.0
      %280 = vmatpush1.msra.mxu0 0.0
      %281 = vmatprep.subr.mxu0 0.0
      %282 = vmatpush1.msra.mxu0 0.0
      %283 = vmatprep.subr.mxu0 0.0
      %284 = vmatpush1.msra.mxu0 0.0
      %285 = vmatprep.subr.mxu0 0.0
      %286 = vmatpush1.msra.mxu0 0.0
      %287 = vmatprep.subr.mxu0 0.0
      %288 = vmatpush1.msra.mxu0 0.0
      %289 = vmatprep.subr.mxu0 0.0
      %290 = vmatpush1.msra.mxu0 0.0
      %291 = vmatprep.subr.mxu0 0.0
      %292 = vmatpush1.msra.mxu0 0.0
      %293 = vmatprep.subr.mxu0 0.0
      %294 = vmatpush1.msra.mxu0 0.0
      %295 = vmatprep.subr.mxu0 0.0
      %296 = vmatpush1.msra.mxu0 0.0
      %297 = vmatprep.subr.mxu0 0.0
      %298 = vmatpush1.msra.mxu0 0.0
      %299 = vmatprep.mubr.f32.mxu0 0.0
      %300 = vmatmul.mubr.f32.gmra.mrb[0].mxu0 %v213
      %v301 = vpop.f32.mrb[0].mxu0
      %v302 = vadd.f32 %v234, %v301
      %v303 = vpop.f32.mrb[0].mxu0
      %304 = vmatprep.mubr.f32.mxu0 0.0
      %305 = vmatmul.mubr.f32.gmra.mrb[0].mxu0 %v214
      %v306 = vpop.f32.mrb[0].mxu0
      %v307 = vadd.f32 %v234, %v306
      %v308 = vpop.f32.mrb[0].mxu0
      %309 = vmatprep.mubr.f32.mxu0 0.0
      %310 = vmatmul.mubr.f32.gmra.mrb[0].mxu0 %v215
      %v311 = vpop.f32.mrb[0].mxu0
      %v312 = vadd.f32 %v234, %v311
      %v313 = vpop.f32.mrb[0].mxu0
      %314 = vmatprep.mubr.f32.mxu0 0.0
      %315 = vmatmul.mubr.f32.gmra.mrb[0].mxu0 %v216
      %v316 = vpop.f32.mrb[0].mxu0
      %v317 = vadd.f32 %v234, %v316
      %v318 = vpop.f32.mrb[0].mxu0
      %319 = vdwg.mxu0
      %vm320 = vcmask 64512
      %321 = vst.msk [vmem:[%s200] sm:$0xff] %vm320, %v302
      %322 = vst.msk [vmem:[%s200 + $0x8] sm:$0xff] %vm320, %v307
      %323 = vst.msk [vmem:[%s200 + $0x10] sm:$0xff] %vm320, %v312
      %324 = vst.msk [vmem:[%s200 + $0x18] sm:$0xff] %vm320, %v317
      %s325 = smul.u32 4, %s16
      %p326 = scmp.lt.s32.totalorder %s325, 15
      %s327 = scalar_select %p326, %s325, 15
      %s328 = smul.addr %s327, 8
      %s329 = scalar_lea.vmem %s4, %s328
      // Predicated region
      $region37: #{svm_forward.1} parent=35 // pred_check
        %p330 = pneg %p123
      $region38: #{svm_forward.1} parent=35 // pred_check_branch
        %332 = sbr.rel (%p330) target = $region40
      $region39: #{svm_forward.1} parent=35 // pred_region
        %s333 = smul.u32 4, %s16
      $region40: #{svm_forward.1} parent=35 // pred_fallthru
        _
    $region36: #{svm_forward.1} parent=5 // pred_fallthru
      _
    %p334 = scmp.le.s32.totalorder 2, %s11
    // Predicated region
    $region41: #{svm_forward.1} parent=5 // pred_check
      %p335 = pneg %p334
    $region42: #{svm_forward.1} parent=5 // pred_check_branch
      %337 = sbr.rel (%p335) target = $region44
    $region43: #{svm_forward.1} parent=5 // pred_region
      %s338 = ssub.s32 %s11, 2
      // Predicated region
      $region45: #{svm_forward.1} parent=43 // pred_check
        %p339 = pneg %p129
      $region46: #{svm_forward.1} parent=43 // pred_check_branch
        %341 = sbr.rel (%p339) target = $region48
      $region47: #{svm_forward.1} parent=43 // pred_region
        %s342 = smul.u32 4, %s17
        %p343 = scmp.lt.s32.totalorder %s342, 15
        %s344 = scalar_select %p343, %s342, 15
        %s345 = smul.addr %s344, 8
        %s346 = scalar_lea.vmem %s4, %s345
      $region48: #{svm_forward.1} parent=43 // pred_fallthru
        _
    $region44: #{svm_forward.1} parent=5 // pred_fallthru
      _
  $region6: #{svm_forward.1} parent=0 // loop_footer
    %s15 = sadd.s32 1, %s11
  $region7: #{svm_forward.1} parent=0 // loop_footer_branch
    %10 = sbr.rel target = $region3
  $region8: #{svm_forward.1} parent=0 // loop_exit
    _

</llo_original>
